<compile_context>
chip_gen: v7x
topology: tpu7x:2x2x1
jax: 0.10.0
libtpu: 0.0.40
codegen_flags: <defaults>
</compile_context>

<pallas_src>
import functools

import jax
import jax.numpy as jnp
from jax.experimental import pallas as pl
from jax.experimental.pallas import tpu as pltpu


# ---------------------------------------------------------------------------
# Kernels
# ---------------------------------------------------------------------------

def project_kernel(x_ref, w_ref, out_ref):
    """out = X_tile @ W   (feature projection, lane-padded output)."""
    out_ref[...] = jnp.dot(
        x_ref[...], w_ref[...], preferred_element_type=jnp.float32
    ).astype(out_ref.dtype)


def layer1_kernel(a_ref, xw_ref, b1_ref, w2_ref, out_ref):
    """out = relu(A_tile @ (X W1) + b1) @ W2   (bf16 out, f32 accumulation)."""
    h = jnp.dot(a_ref[...], xw_ref[...], preferred_element_type=jnp.float32)
    h = jnp.maximum(h + b1_ref[...], 0.0)          # GCNConv bias + relu (f32)
    # TODO(synk): F.dropout(training=True) would need pltpu.prng_seed /
    # prng_random_bits; eval-mode (identity) semantics are implemented here.
    out_ref[...] = jnp.dot(
        h, w2_ref[...], preferred_element_type=jnp.float32
    ).astype(out_ref.dtype)


def layer2_kernel(a_ref, hw_ref, b2_ref, logp_ref, z_ref, *, num_classes):
    """z = A_tile @ (H W2) + b2 ; logp = log_softmax(z) over real classes."""
    z = jnp.dot(a_ref[...], hw_ref[...], preferred_element_type=jnp.float32)
    z = z + b2_ref[...]
    z_ref[...] = z
    # Padded class lanes contain zeros -> mask them out of the reduction.
    col = jax.lax.broadcasted_iota(jnp.int32, z.shape, 1)
    zm = jnp.where(col < num_classes, z, -jnp.inf)
    m = jnp.max(zm, axis=1, keepdims=True)
    lse = m + jnp.log(jnp.sum(jnp.exp(zm - m), axis=1, keepdims=True))
    logp_ref[...] = z - lse


# ---------------------------------------------------------------------------
# Wrapper
# ---------------------------------------------------------------------------

def _round_up(v, m):
    return (v + m - 1) // m * m


def _pad2(a, rows, cols):
    r, c = a.shape
    return jnp.pad(a, ((0, rows - r), (0, cols - c)))


def net_batched_forward(x, a_hat, w1, b1, w2, b2):
    """Fused PI-GCN forward. Returns (log_softmax(z, axis=1), z)."""
    n, f_in = x.shape
    hid = w1.shape[1]
    c = w2.shape[1]

    hp = _round_up(hid, 128)            # lane-dense hidden width
    cp = _round_up(c, 128)              # lane-dense class width
    tm = min(256, _round_up(n, 16))     # row tile over the node dimension
    num_tiles = pl.cdiv(n, tm)
    n_pad = num_tiles * tm

    # bf16 for the O(N^2) adjacency and the resident projected operands;
    # weights / biases stay f32, all accumulation is f32.
    a_bf = _pad2(a_hat.astype(jnp.float32), n_pad, n_pad).astype(jnp.bfloat16)
    x_p = _pad2(x.astype(jnp.float32), n_pad, f_in)
    w1_p = _pad2(w1.astype(jnp.float32), f_in, hp)
    b1_p = _pad2(b1.reshape(1, -1).astype(jnp.float32), 1, hp)
    w2_p = _pad2(w2.astype(jnp.float32), hp, cp)
    b2_p = _pad2(b2.reshape(1, -1).astype(jnp.float32), 1, cp)

    parallel = pltpu.CompilerParams(dimension_semantics=("parallel",))

    # ---- call 1: XW1 = X @ W1  (hoisted out of the A-tile loops) ----------
    xw1 = pl.pallas_call(
        project_kernel,
        out_shape=jax.ShapeDtypeStruct((n_pad, hp), jnp.bfloat16),
        grid=(num_tiles,),
        in_specs=[pl.BlockSpec((tm, f_in), lambda i: (i, 0)),
                  pl.BlockSpec((f_in, hp), lambda i: (0, 0))],
        out_specs=pl.BlockSpec((tm, hp), lambda i: (i, 0)),
        compiler_params=parallel,
    )(x_p, w1_p)

    # ---- call 2: HW2 = relu(A @ XW1 + b1) @ W2  (row-tiled over A) --------
    flops1 = 2 * n_pad * n_pad * hp + 2 * n_pad * hp * cp
    bytes1 = int(2 * (a_bf.size + xw1.size + n_pad * cp)
                 + 4 * (w2_p.size + b1_p.size))
    hw2 = pl.pallas_call(
        layer1_kernel,
        out_shape=jax.ShapeDtypeStruct((n_pad, cp), jnp.bfloat16),
        grid=(num_tiles,),
        in_specs=[pl.BlockSpec((tm, n_pad), lambda i: (i, 0)),    # A tile
                  pl.BlockSpec((n_pad, hp), lambda i: (0, 0)),    # XW1 resident
                  pl.BlockSpec((1, hp), lambda i: (0, 0)),        # b1
                  pl.BlockSpec((hp, cp), lambda i: (0, 0))],      # W2
        out_specs=pl.BlockSpec((tm, cp), lambda i: (i, 0)),
        compiler_params=parallel,
        cost_estimate=pl.CostEstimate(flops=flops1, transcendentals=0,
                                      bytes_accessed=bytes1),
    )(a_bf, xw1, b1_p, w2_p)

    # ---- call 3: z = A @ HW2 + b2 ; logp = log_softmax(z) ------------------
    flops2 = 2 * n_pad * n_pad * cp + 6 * n_pad * cp
    bytes2 = int(2 * (a_bf.size + hw2.size) + 4 * (2 * n_pad * cp + b2_p.size))
    logp_p, z_p = pl.pallas_call(
        functools.partial(layer2_kernel, num_classes=c),
        out_shape=(jax.ShapeDtypeStruct((n_pad, cp), jnp.float32),
                   jax.ShapeDtypeStruct((n_pad, cp), jnp.float32)),
        grid=(num_tiles,),
        in_specs=[pl.BlockSpec((tm, n_pad), lambda i: (i, 0)),    # A tile
                  pl.BlockSpec((n_pad, cp), lambda i: (0, 0)),    # HW2 resident
                  pl.BlockSpec((1, cp), lambda i: (0, 0))],       # b2
        out_specs=(pl.BlockSpec((tm, cp), lambda i: (i, 0)),
                   pl.BlockSpec((tm, cp), lambda i: (i, 0))),
        compiler_params=parallel,
        cost_estimate=pl.CostEstimate(flops=flops2, transcendentals=n_pad * cp,
                                      bytes_accessed=bytes2),
    )(a_bf, hw2, b2_p)

    return logp_p[:n, :c], z_p[:n, :c]


def build_normalized_adjacency(edge_index, num_nodes):
    """A_hat = D^{-1/2} (A + I) D^{-1/2}  (dense glue, outside the kernels).

    Duplicate edges sum-aggregate (matching PyG GCNConv message passing),
    edges are used as given (row = target, col = source, no forced
    symmetrization), and self loops are added via +I.
    """
    src, dst = edge_index[0], edge_index[1]
    a = jnp.zeros((num_nodes, num_nodes), jnp.float32)
    a = a.at[dst, src].add(1.0)
    a = a + jnp.eye(num_nodes, dtype=jnp.float32)
    deg = jnp.sum(a, axis=1)
    d_inv_sqrt = jnp.where(deg > 0, 1.0 / jnp.sqrt(deg), 0.0)
    return a * d_inv_sqrt[:, None] * d_inv_sqrt[None, :]
    # TODO(synk): for production-scale graphs replace the dense O(N^2) A_hat
    # with a PrefetchScalarGridSpec CSR/edge-block gather formulation.


if __name__ == "__main__":
    # Small synthetic problem consistent with the module:
    #   N nodes, F_in node features, hidden=16, C classes.
    N, F_IN, HID, C = 16, 8, 16, 4

    key = jax.random.PRNGKey(0)
    kx, ke, kw1, kw2 = jax.random.split(key, 4)

    x = jax.random.normal(kx, (N, F_IN), dtype=jnp.float32)

    E = 40
    edge_index = jax.random.randint(ke, (2, E), 0, N, dtype=jnp.int32)
    a_hat = build_normalized_adjacency(edge_index, N)

    w1 = (jax.random.normal(kw1, (F_IN, HID), dtype=jnp.float32)
          * (2.0 / (F_IN + HID)) ** 0.5)
    b1 = jnp.zeros((1, HID), dtype=jnp.float32)
    w2 = (jax.random.normal(kw2, (HID, C), dtype=jnp.float32)
          * (2.0 / (HID + C)) ** 0.5)
    b2 = jnp.zeros((1, C), dtype=jnp.float32)

    logp, z = net_batched_forward(x, a_hat, w1, b1, w2, b2)
    jax.block_until_ready((logp, z))

    # Pure-JAX reference mirroring the kernel's bf16-storage / f32-accumulate
    # pipeline (HIGHEST precision on the f32 matmuls for a tight comparison).
    hi = jax.lax.Precision.HIGHEST
    a_q = a_hat.astype(jnp.bfloat16).astype(jnp.float32)
    xw1_r = jnp.dot(x, w1, precision=hi).astype(jnp.bfloat16).astype(jnp.float32)
    h_r = jnp.maximum(jnp.dot(a_q, xw1_r, precision=hi) + b1, 0.0)
    hw2_r = jnp.dot(h_r, w2, precision=hi).astype(jnp.bfloat16).astype(jnp.float32)
    z_r = jnp.dot(a_q, hw2_r, precision=hi) + b2
    logp_r = z_r - jax.scipy.special.logsumexp(z_r, axis=1, keepdims=True)

    assert logp.shape == (N, C) and z.shape == (N, C), "bad output shapes"
    assert jnp.allclose(z, z_r, atol=1e-2, rtol=1e-2), "logits mismatch"
    assert jnp.allclose(logp, logp_r, atol=1e-2, rtol=1e-2), "log_softmax mismatch"

    print("KERNEL_OK")
</pallas_src>

<mosaic_0001>
module attributes {stable_mosaic.version = 11 : i64} {
  func.func @project_kernel(%arg0: i32, %arg1: memref<16x8xf32, #tpu.memory_space<vmem>>, %arg2: memref<8x128xf32, #tpu.memory_space<vmem>>, %arg3: memref<16x128xbf16, #tpu.memory_space<vmem>>) attributes {dimension_semantics = [#tpu.dimension_semantics<parallel>], iteration_bounds = array<i64: 1>, scalar_prefetch = 0 : i64, scratch_operands = 0 : i64, tpu.core_type = #tpu.core_type<tc>, window_params = [{transform_indices = @transform_0, window_bounds = array<i64: 16, 8>}, {pipeline_mode = #tpu.pipeline_mode<synchronous>, transform_indices = @transform_1, window_bounds = array<i64: 8, 128>}, {transform_indices = @transform_2, window_bounds = array<i64: 16, 128>}]} {
    %c0 = arith.constant 0 : index
    %c0_0 = arith.constant 0 : index
    %0 = vector.load %arg1[%c0, %c0_0] : memref<16x8xf32, #tpu.memory_space<vmem>>, vector<16x8xf32>
    %c0_1 = arith.constant 0 : index
    %c0_2 = arith.constant 0 : index
    %1 = vector.load %arg2[%c0_1, %c0_2] : memref<8x128xf32, #tpu.memory_space<vmem>>, vector<8x128xf32>
    %cst = arith.constant dense<0.000000e+00> : vector<16x128xf32>
    %2 = tpu.matmul %0, %1, %cst {dimension_numbers = #tpu.dot_dimension_numbers<[1], [0], [0], [1], [0, 0, 1, 1], [], []>} : vector<16x8xf32>, vector<8x128xf32>, vector<16x128xf32> -> vector<16x128xf32>
    %3 = arith.truncf %2 : vector<16x128xf32> to vector<16x128xbf16>
    %c0_3 = arith.constant 0 : index
    %c0_4 = arith.constant 0 : index
    %4 = vector.load %arg3[%c0_3, %c0_4] : memref<16x128xbf16, #tpu.memory_space<vmem>>, vector<16x128xbf16>
    tpu.vector_store %arg3[%c0_3, %c0_4], %3 {strides = array<i32>} : memref<16x128xbf16, #tpu.memory_space<vmem>>, vector<16x128xbf16>,
    return
  }
  func.func @transform_0(%arg0: i32) -> (i32, i32) {
    %c0_i32 = arith.constant 0 : i32
    %c0_i32_0 = arith.constant 0 : i32
    return %arg0, %c0_i32 : i32, i32
  }
  func.func @transform_1(%arg0: i32) -> (i32, i32) {
    %c0_i32 = arith.constant 0 : i32
    %c0_i32_0 = arith.constant 0 : i32
    %c0_i32_1 = arith.constant 0 : i32
    return %c0_i32, %c0_i32_0 : i32, i32
  }
  func.func @transform_2(%arg0: i32) -> (i32, i32) {
    %c0_i32 = arith.constant 0 : i32
    %c0_i32_0 = arith.constant 0 : i32
    return %arg0, %c0_i32 : i32, i32
  }
}

</mosaic_0001>

<llo_original>
// kernel: tpu_custom_call.1
$region0: #{tpu_custom_call.1}
  #allocation0 [shape = 'u32[]', space=smem, size = 0x4, offset = 0x4, fixed_abs, tag = 'smem constant byte address 0x4 - core index']
  #allocation1 [shape = 'u32[144,128]{1,0:T(1,128)}', space=vmem, size = 0x12000, scoped, tag = 'internal scratch']
  %s0 = inlined_call_operand.vmem [shape: f32[16,8], index: 0, kind: input, shape index: {}]
  %s1 = inlined_call_operand.vmem [shape: f32[8,128], index: 1, kind: input, shape index: {}]
  %s2 = inlined_call_operand.hbm [shape: bf16[16,128], index: 2, kind: output, shape index: {}]
  %s3 = sld [smem:[#allocation0]]
  $region18: #{tpu_custom_call.1} parent=0
    _
  %s5 = ssub.s32 1, %s3
  %s6 = scalar_select 0, %s5, %s3
  $region1: #{tpu_custom_call.1} parent=0
    #allocation2 [shape = 'u8[4096]{0}', space=vmem, size = 0x1000, scoped, tag = 'output window, operand 0, single buffered']
    #allocation3 [shape = 's32[1]{0}', space=sflag, size = 0x4, scoped, tag = 'scoped memory for tpu_custom_call.1']
    %7 = vsyncpa [#allocation3], 0
    // Predicated region
    $region2: #{tpu_custom_call.1} parent=1 // pred_check
      _
    $region3: #{tpu_custom_call.1} parent=1 // pred_check_branch
      %9 = sbr.rel (0) target = $region5
    $region4: #{tpu_custom_call.1} parent=1 // pred_region
      _
    $region5: #{tpu_custom_call.1} parent=1 // pred_fallthru
      _
    // Predicated region
    $region6: #{tpu_custom_call.1} parent=1 // pred_check
      _
    $region7: #{tpu_custom_call.1} parent=1 // pred_check_branch
      %11 = sbr.rel (0) target = $region9
    $region8: #{tpu_custom_call.1} parent=1 // pred_region
      _
    $region9: #{tpu_custom_call.1} parent=1 // pred_fallthru
      _
    %v12 = vld [vmem:[%s0] sm:$0xff]
    %v13 = vld [vmem:[%s0 + $0x8] sm:$0xff]
    %v14 = vld [vmem:[%s1] sm:$0xff]
    %vm15 = vcmask 64512
    %v17 = vsel %vm15, %v12, 0
    %v20 = vsel %vm15, %v13, 0
    %22 = vmatprep.subr.mxu0 0.0
    %23 = vmatpush1.msra.mxu0 %v14
    %24 = vmatprep.subr.mxu0 0.0
    %25 = vmatpush1.msra.mxu0 0.0
    %26 = vmatprep.subr.mxu0 0.0
    %27 = vmatpush1.msra.mxu0 0.0
    %28 = vmatprep.subr.mxu0 0.0
    %29 = vmatpush1.msra.mxu0 0.0
    %30 = vmatprep.subr.mxu0 0.0
    %31 = vmatpush1.msra.mxu0 0.0
    %32 = vmatprep.subr.mxu0 0.0
    %33 = vmatpush1.msra.mxu0 0.0
    %34 = vmatprep.subr.mxu0 0.0
    %35 = vmatpush1.msra.mxu0 0.0
    %36 = vmatprep.subr.mxu0 0.0
    %37 = vmatpush1.msra.mxu0 0.0
    %38 = vmatprep.subr.mxu0 0.0
    %39 = vmatpush1.msra.mxu0 0.0
    %40 = vmatprep.subr.mxu0 0.0
    %41 = vmatpush1.msra.mxu0 0.0
    %42 = vmatprep.subr.mxu0 0.0
    %43 = vmatpush1.msra.mxu0 0.0
    %44 = vmatprep.subr.mxu0 0.0
    %45 = vmatpush1.msra.mxu0 0.0
    %46 = vmatprep.subr.mxu0 0.0
    %47 = vmatpush1.msra.mxu0 0.0
    %48 = vmatprep.subr.mxu0 0.0
    %49 = vmatpush1.msra.mxu0 0.0
    %50 = vmatprep.subr.mxu0 0.0
    %51 = vmatpush1.msra.mxu0 0.0
    %52 = vmatprep.subr.mxu0 0.0
    %53 = vmatpush1.msra.mxu0 0.0
    %54 = vmatprep.subr.mxu0 0.0
    %55 = vmatpush1.msra.mxu0 0.0
    %56 = vmatprep.subr.mxu0 0.0
    %57 = vmatpush1.msra.mxu0 0.0
    %58 = vmatprep.subr.mxu0 0.0
    %59 = vmatpush1.msra.mxu0 0.0
    %60 = vmatprep.subr.mxu0 0.0
    %61 = vmatpush1.msra.mxu0 0.0
    %62 = vmatprep.subr.mxu0 0.0
    %63 = vmatpush1.msra.mxu0 0.0
    %64 = vmatprep.subr.mxu0 0.0
    %65 = vmatpush1.msra.mxu0 0.0
    %66 = vmatprep.subr.mxu0 0.0
    %67 = vmatpush1.msra.mxu0 0.0
    %68 = vmatprep.subr.mxu0 0.0
    %69 = vmatpush1.msra.mxu0 0.0
    %70 = vmatprep.subr.mxu0 0.0
    %71 = vmatpush1.msra.mxu0 0.0
    %72 = vmatprep.subr.mxu0 0.0
    %73 = vmatpush1.msra.mxu0 0.0
    %74 = vmatprep.subr.mxu0 0.0
    %75 = vmatpush1.msra.mxu0 0.0
    %76 = vmatprep.subr.mxu0 0.0
    %77 = vmatpush1.msra.mxu0 0.0
    %78 = vmatprep.subr.mxu0 0.0
    %79 = vmatpush1.msra.mxu0 0.0
    %80 = vmatprep.subr.mxu0 0.0
    %81 = vmatpush1.msra.mxu0 0.0
    %82 = vmatprep.subr.mxu0 0.0
    %83 = vmatpush1.msra.mxu0 0.0
    %84 = vmatprep.subr.mxu0 0.0
    %85 = vmatpush1.msra.mxu0 0.0
    %86 = vmatprep.mubr.f32.mxu0 0.0
    %87 = vmatmul.mubr.f32.gmra.mrb[0].mxu0 %v17
    %v88 = vpop.f32.mrb[0].mxu0
    %v89 = vadd.f32 0.0, %v88
    %v90 = vpop.f32.mrb[0].mxu0
    %91 = vmatprep.mubr.f32.mxu0 0.0
    %92 = vmatmul.mubr.f32.gmra.mrb[0].mxu0 %v20
    %v93 = vpop.f32.mrb[0].mxu0
    %v94 = vadd.f32 0.0, %v93
    %v95 = vpop.f32.mrb[0].mxu0
    %96 = vdwg.mxu0
    %v97 = vpack.c.bf16 %v94, %v89
    %v99 = vunpack.c.l.b16 %v97
    %v100 = vunpack.c.h.b16 %v97
    %v101 = vpack.c.b16 %v99, %v99
    %v102 = vpack.c.b16 %v100, %v100
    %105 = vst [vmem:[#allocation2] sm:$0xf] %v101
    %106 = vst [vmem:[#allocation2 + $0x4] sm:$0xf] %v102
    // Predicated region
    $region10: #{tpu_custom_call.1} parent=1 // pred_check
      _
    $region11: #{tpu_custom_call.1} parent=1 // pred_check_branch
      %108 = sbr.rel (0) target = $region13
    $region12: #{tpu_custom_call.1} parent=1 // pred_region
      %s110 = ssub.s32 128, 128
      %111 = vsyncadd [#allocation3], %s110
      %s112 = sshll.u32 [#allocation2], 4
      %s113 = int_to_ptr.vmem [resolvable:$true] %s112
      %118 = dma.vmem_to_hbm [thread:$0]  %s113, 128, %s2, [#allocation3], 64, 64, 4
    $region13: #{tpu_custom_call.1} parent=1 // pred_fallthru
      _
    // Predicated region
    $region14: #{tpu_custom_call.1} parent=1 // pred_check
      _
    $region15: #{tpu_custom_call.1} parent=1 // pred_check_branch
      %120 = sbr.rel (0) target = $region17
    $region16: #{tpu_custom_call.1} parent=1 // pred_region
      %121 = dma.done [#allocation3], 128
    $region17: #{tpu_custom_call.1} parent=1 // pred_fallthru
      _
    %122 = vsyncpa [#allocation3], 1

</llo_original>
